<compile_context>
chip_gen: v7x
topology: tpu7x:2x2x1
jax: 0.10.0
libtpu: 0.0.40
codegen_flags: <defaults>
</compile_context>

<pallas_src>
import math

import jax
import jax.numpy as jnp
import numpy as np
from jax.experimental import pallas as pl
from jax.experimental.pallas import tpu as pltpu

# ---- model dimensions (small, consistent with the module's shape logic) ----
B = 2          # batch
S = 8          # sequence length
D = 32         # n_embd
H = 4          # n_head
HD = D // H    # head_dim = 8
ROT = 4        # rotary_dim (< head_dim, as in Phi)
RH = ROT // 2  # half rotary dim (cos/sin width)
NI = 64        # n_inner (MLP hidden)
LN_EPS = 1e-5  # layer_norm_epsilon
SCALE = 1.0 / math.sqrt(HD)

BS = B * S             # folded rows = 16
QKV = 3 * D            # 96
PROJ_W = 2 * QKV + NI  # 256 = [qkv | qkv_rot | fc1]   (keep 256: one MXU tile)
OUT_PAD = 128          # lane-padded output: [y(32) | k(32) | v(32) | pad(32)]

# bf16 weight slab layout (rows x 256)
WSLAB_R = D + D + NI   # 128: rows 0..31 = wbig, rows 32..127 cols 0..31 = wout2,
                       #      rows 32..95 cols 32..63 = head mask

# f32 constants slab layout ((88, 256))
ROW_BBIG = 0           # fused projection bias (1, 256)
ROW_MISC = 1           # ln_w[0:32] | ln_b[32:64] | bout[64:96]
ROW_ROPE = 8           # rope_a cols 0..95, rope_b cols 96..191  (16 rows)
ROW_AMASK = 24         # additive causal/cross-batch mask (64, 16)
CONST_R = ROW_AMASK + H * BS   # 88 (multiple of 8)
CONST_W = 256


def _gelu_tanh(x):
    # tanh-approx GELU: 0.5*x*(1+tanh(sqrt(2/pi)*(x+0.044715*x^3)))
    # (error ~1e-3 vs exact erf GELU; tanh goes to the EUP, short VPU chain)
    c = math.sqrt(2.0 / math.pi)
    return 0.5 * x * (1.0 + jnp.tanh(c * (x + 0.044715 * x * x * x)))


def phi_block_kernel(x_ref, w_ref, c_ref, out_ref):
    x = x_ref[...]                                            # (BS, D) f32

    # ---- LayerNorm (biased variance, like torch.nn.LayerNorm) ----
    ln_w = c_ref[ROW_MISC:ROW_MISC + 1, 0:D]                  # (1, D)
    ln_b = c_ref[ROW_MISC:ROW_MISC + 1, D:2 * D]
    mean = jnp.mean(x, axis=-1, keepdims=True)
    var = jnp.mean((x - mean) ** 2, axis=-1, keepdims=True)
    ln = (x - mean) * jax.lax.rsqrt(var + LN_EPS)
    ln = ln * ln_w + ln_b                                     # (BS, D)

    # ---- one wide projection: [Wqkv*s | (Wqkv*s)@P_rot | Wfc1] (bf16 MXU) ----
    wbig = w_ref[0:D, :]                                      # (D, 256) bf16
    bbig = c_ref[ROW_BBIG:ROW_BBIG + 1, :]                    # (1, 256) f32
    proj = jnp.dot(ln.astype(jnp.bfloat16), wbig,
                   preferred_element_type=jnp.float32) + bbig
    qkv = proj[:, :QKV]                                       # (BS, 3D)
    qkv_rot = proj[:, QKV:2 * QKV]                            # rotate-half partners
    h1 = proj[:, 2 * QKV:]                                    # (BS, NI) fc1 pre-act

    # ---- rope on the whole qkv slab (V / pass-through columns: A=1, B=0) ----
    rope_a = c_ref[ROW_ROPE:ROW_ROPE + BS, 0:QKV]             # (BS, 3D)
    rope_b = c_ref[ROW_ROPE:ROW_ROPE + BS, QKV:2 * QKV]
    roped = qkv * rope_a + qkv_rot * rope_b                   # (BS, 3D) f32

    # k|v cache slab is already contiguous: store it now (off the critical path)
    out_ref[:, D:3 * D] = roped[:, D:]

    # single bf16 cast of the whole roped slab
    roped_bf = roped.astype(jnp.bfloat16)
    q_bf = roped_bf[:, :D]                                    # scale pre-folded
    k_bf = roped_bf[:, D:2 * D]
    v_bf = roped_bf[:, 2 * D:]

    # ---- attention: all heads fused via head-block-diagonal matmuls ----
    head_mask = w_ref[D:D + H * BS, D:2 * D]                  # (H*BS, D) bf16, 0/1
    q_bd = jnp.tile(q_bf, (H, 1)) * head_mask                 # (H*BS, D) bf16
    scores = jax.lax.dot_general(
        q_bd, k_bf,
        dimension_numbers=(((1,), (1,)), ((), ())),
        preferred_element_type=jnp.float32)                   # (H*BS, BS)
    # precomputed additive mask: causal within batch + cross-batch block
    scores = scores + c_ref[ROW_AMASK:ROW_AMASK + H * BS, 0:BS]

    m = jnp.max(scores, axis=-1, keepdims=True)
    e = jnp.exp(scores - m)
    probs = e * pl.reciprocal(jnp.sum(e, axis=-1, keepdims=True), approx=True)

    o_bd = jnp.dot(probs.astype(jnp.bfloat16), v_bf,
                   preferred_element_type=jnp.float32)        # (H*BS, D)
    o_bd = o_bd * head_mask
    attn = o_bd[0:BS]
    for hh in range(1, H):                                    # static, H=4
        attn = attn + o_bd[hh * BS:(hh + 1) * BS]             # (BS, D)

    # ---- fused output projection + MLP fc2: [attn | gelu(h1)] @ [Wout; Wfc2]
    h1a = _gelu_tanh(h1)
    cat = jnp.concatenate([attn, h1a], axis=-1).astype(jnp.bfloat16)  # (BS, D+NI)
    wout2 = w_ref[D:D + D + NI, 0:D]                          # (D+NI, D) bf16
    bout = c_ref[ROW_MISC:ROW_MISC + 1, 2 * D:3 * D]          # (1, D)
    y = jnp.dot(cat, wout2, preferred_element_type=jnp.float32) + bout + x
    out_ref[:, :D] = y


def fuse_params(params, cos, sin):
    """Host-side one-time weight fusion + constant-slab construction."""
    cos = np.asarray(cos, np.float32)
    sin = np.asarray(sin, np.float32)

    # rotate-half permutation over the fused qkv columns (Q and K rotary dims)
    P = np.zeros((QKV, QKV), np.float32)
    for part in range(2):                       # Q, K
        for h in range(H):
            base = part * D + h * HD
            for d in range(RH):
                P[base + d + RH, base + d] = 1.0   # col d       <- partner d+RH
                P[base + d, base + d + RH] = 1.0   # col d+RH    <- partner d

    # per-position rope multiply tables over the folded (B*S, 3D) layout
    A = np.ones((BS, QKV), np.float32)
    Bt = np.zeros((BS, QKV), np.float32)
    for r in range(BS):
        t = r % S
        for part in range(2):
            for h in range(H):
                base = part * D + h * HD
                for d in range(ROT):
                    A[r, base + d] = cos[t, d % RH]
                    Bt[r, base + d] = (-sin[t, d]) if d < RH else sin[t, d - RH]

    wqkv = np.asarray(params["wqkv_t"], np.float32).copy()   # (D, 3D)
    bqkv = np.asarray(params["bqkv"], np.float32).copy()     # (1, 3D)
    wfc1 = np.asarray(params["wfc1_t"], np.float32)          # (D, NI)
    wout = np.asarray(params["wout_t"], np.float32)          # (D, D)
    wfc2 = np.asarray(params["wfc2_t"], np.float32)          # (NI, D)

    # fold softmax scale into the Q columns (rope is linear, so pre-rope is fine)
    wqkv[:, :D] *= SCALE
    bqkv[:, :D] *= SCALE

    wbig = np.concatenate([wqkv, wqkv @ P, wfc1], axis=1)                  # (D, 256)
    bbig = np.concatenate([bqkv, bqkv @ P, np.zeros((1, NI), np.float32)], axis=1)
    wout2 = np.concatenate([wout, wfc2], axis=0)                           # (D+NI, D)

    # static head-selector mask (H*BS, D): 1 where column belongs to row-block's head
    hm = np.zeros((H * BS, D), np.float32)
    for r in range(H * BS):
        h = r // BS
        hm[r, h * HD:(h + 1) * HD] = 1.0

    # static additive attention mask (H*BS, BS): causal within batch, block cross-batch
    am = np.full((H * BS, BS), -10000.0, np.float32)
    for r in range(H * BS):
        ri = r % BS
        for c in range(BS):
            if (ri // S == c // S) and (c <= ri):
                am[r, c] = 0.0

    # bf16 weight slab (128, 256)
    wslab = np.zeros((WSLAB_R, PROJ_W), np.float32)
    wslab[0:D, :] = wbig
    wslab[D:D + D + NI, 0:D] = wout2
    wslab[D:D + H * BS, D:2 * D] = hm

    # f32 constants slab (88, 256)
    consts = np.zeros((CONST_R, CONST_W), np.float32)
    consts[ROW_BBIG, :PROJ_W] = bbig[0]
    consts[ROW_MISC, 0:D] = np.asarray(params["ln_w"], np.float32)[0]
    consts[ROW_MISC, D:2 * D] = np.asarray(params["ln_b"], np.float32)[0]
    consts[ROW_MISC, 2 * D:3 * D] = np.asarray(params["bout"], np.float32)[0]
    consts[ROW_ROPE:ROW_ROPE + BS, 0:QKV] = A
    consts[ROW_ROPE:ROW_ROPE + BS, QKV:2 * QKV] = Bt
    consts[ROW_AMASK:ROW_AMASK + H * BS, 0:BS] = am

    return {
        "wslab": jnp.asarray(wslab, jnp.bfloat16),
        "consts": jnp.asarray(consts, jnp.float32),
    }


def phi_block_forward(x, fused):
    """x: (B, S, D) f32. Returns (out (B,S,D), (k_cache, v_cache) each (B,S,H,HD))."""
    xf = x.reshape(BS, D)
    vmem = lambda: pl.BlockSpec(memory_space=pltpu.MemorySpace.VMEM)

    slab = pl.pallas_call(
        phi_block_kernel,
        out_shape=jax.ShapeDtypeStruct((BS, OUT_PAD), jnp.float32),
        in_specs=[vmem(), vmem(), vmem()],
        out_specs=vmem(),
    )(xf, fused["wslab"], fused["consts"])

    out = slab[:, :D].reshape(B, S, D)
    k_cache = slab[:, D:2 * D].reshape(B, S, H, HD)
    v_cache = slab[:, 2 * D:3 * D].reshape(B, S, H, HD)
    return out, (k_cache, v_cache)


# ---------------- plain-JAX reference (mirrors the PyTorch code) -------------
def reference_phi_block(x, p, cos, sin):
    mean = x.mean(-1, keepdims=True)
    var = ((x - mean) ** 2).mean(-1, keepdims=True)
    ln = (x - mean) / jnp.sqrt(var + LN_EPS) * p["ln_w"][0] + p["ln_b"][0]

    qkv = ln @ p["wqkv_t"] + p["bqkv"][0]
    qkv = qkv.reshape(B, S, 3, H, HD)
    q, k, v = qkv[:, :, 0], qkv[:, :, 1], qkv[:, :, 2]

    def rope(t):
        t1, t2, tp = t[..., :RH], t[..., RH:ROT], t[..., ROT:]
        c = cos[None, :, None, :]
        s = sin[None, :, None, :]
        return jnp.concatenate([t1 * c - t2 * s, t1 * s + t2 * c, tp], axis=-1)

    q, k = rope(q), rope(k)
    aw = jnp.einsum("bthd,bshd->bhts", q, k * SCALE)
    causal = jnp.triu(jnp.full((S, S), -10000.0, dtype=jnp.float32), 1)
    aw = jax.nn.softmax(aw + causal, axis=-1)
    ao = jnp.einsum("bhts,bshd->bthd", aw, v).reshape(B, S, D)
    attn = ao @ p["wout_t"] + p["bout"][0]

    h1 = ln @ p["wfc1_t"]
    h1 = 0.5 * h1 * (1.0 + jax.scipy.special.erf(h1 / math.sqrt(2.0)))
    h2 = h1 @ p["wfc2_t"]
    return attn + h2 + x, (k, v)


def make_params_and_rotary(key):
    ks = jax.random.split(key, 10)
    n = lambda k, shape, scale: (jax.random.normal(k, shape, jnp.float32) * scale)
    params = {
        "ln_w": 1.0 + n(ks[0], (1, D), 0.05),
        "ln_b": n(ks[1], (1, D), 0.05),
        "wqkv_t": n(ks[2], (D, 3 * D), 1.0 / math.sqrt(D)),
        "bqkv": n(ks[3], (1, 3 * D), 0.02),
        "wout_t": n(ks[4], (D, D), 1.0 / math.sqrt(D)),
        "bout": n(ks[5], (1, D), 0.02),
        "wfc1_t": n(ks[6], (D, NI), 1.0 / math.sqrt(D)),
        "wfc2_t": n(ks[7], (NI, D), 1.0 / math.sqrt(NI)),
    }
    # RotaryEmbedding tables (seqlen_offset = 0, kv_cache = None)
    inv_freq = jnp.array([1.0 / 10000.0 ** (i / ROT) for i in range(0, ROT, 2)],
                         dtype=jnp.float32).reshape(1, RH)
    t = jnp.arange(S, dtype=jnp.float32).reshape(S, 1)
    freqs = t @ inv_freq
    return params, jnp.cos(freqs), jnp.sin(freqs), ks[8]


if __name__ == "__main__":
    key = jax.random.PRNGKey(0)
    params, cos, sin, xkey = make_params_and_rotary(key)
    x = jax.random.normal(xkey, (B, S, D), jnp.float32)

    fused = fuse_params(params, cos, sin)
    out, (k_cache, v_cache) = phi_block_forward(x, fused)
    jax.block_until_ready(out)
    jax.block_until_ready(k_cache)
    jax.block_until_ready(v_cache)

    ref_out, (ref_k, ref_v) = reference_phi_block(x, params, cos, sin)

    # bf16 MXU inputs with f32 accumulation + tanh-gelu: slightly loose tolerance
    np.testing.assert_allclose(np.asarray(out), np.asarray(ref_out),
                               rtol=3e-2, atol=3e-2)
    np.testing.assert_allclose(np.asarray(k_cache), np.asarray(ref_k),
                               rtol=3e-2, atol=3e-2)
    np.testing.assert_allclose(np.asarray(v_cache), np.asarray(ref_v),
                               rtol=3e-2, atol=3e-2)

    print("KERNEL_OK")
</pallas_src>

<mosaic_0001>
module attributes {stable_mosaic.version = 11 : i64} {
  func.func @phi_block_kernel(%arg0: memref<16x32xf32, #tpu.memory_space<vmem>>, %arg1: memref<128x256xbf16, #tpu.memory_space<vmem>>, %arg2: memref<88x256xf32, #tpu.memory_space<vmem>>, %arg3: memref<16x128xf32, #tpu.memory_space<vmem>>) attributes {dimension_semantics = [], scalar_prefetch = 0 : i64, scratch_operands = 0 : i64, tpu.core_type = #tpu.core_type<tc>} {
    %c0 = arith.constant 0 : index
    %c0_0 = arith.constant 0 : index
    %0 = vector.load %arg0[%c0, %c0_0] : memref<16x32xf32, #tpu.memory_space<vmem>>, vector<16x32xf32>
    %c1 = arith.constant 1 : index
    %c0_1 = arith.constant 0 : index
    %1 = vector.load %arg2[%c1, %c0_1] : memref<88x256xf32, #tpu.memory_space<vmem>>, vector<1x32xf32>
    %c1_2 = arith.constant 1 : index
    %c32 = arith.constant 32 : index
    %2 = vector.load %arg2[%c1_2, %c32] : memref<88x256xf32, #tpu.memory_space<vmem>>, vector<1x32xf32>
    %cst = arith.constant dense<0.000000e+00> : vector<16xf32>
    %3 = vector.multi_reduction <add>, %0, %cst [1] : vector<16x32xf32> to vector<16xf32>
    %4 = vector.shape_cast %3 : vector<16xf32> to vector<16x1xf32>
    %cst_3 = arith.constant 3.200000e+01 : f32
    %5 = vector.broadcast %cst_3 : f32 to vector<16x1xf32>
    %6 = arith.divf %4, %5 : vector<16x1xf32>
    %7 = vector.broadcast %6 : vector<16x1xf32> to vector<16x32xf32>
    %8 = arith.subf %0, %7 : vector<16x32xf32>
    %9 = arith.mulf %8, %8 : vector<16x32xf32>
    %cst_4 = arith.constant dense<0.000000e+00> : vector<16xf32>
    %10 = vector.multi_reduction <add>, %9, %cst_4 [1] : vector<16x32xf32> to vector<16xf32>
    %11 = vector.shape_cast %10 : vector<16xf32> to vector<16x1xf32>
    %cst_5 = arith.constant 3.200000e+01 : f32
    %12 = vector.broadcast %cst_5 : f32 to vector<16x1xf32>
    %13 = arith.divf %11, %12 : vector<16x1xf32>
    %14 = vector.broadcast %6 : vector<16x1xf32> to vector<16x32xf32>
    %15 = arith.subf %0, %14 : vector<16x32xf32>
    %cst_6 = arith.constant 9.99999974E-6 : f32
    %16 = vector.broadcast %cst_6 : f32 to vector<16x1xf32>
    %17 = arith.addf %13, %16 : vector<16x1xf32>
    %18 = math.rsqrt %17 : vector<16x1xf32>
    %19 = vector.broadcast %18 : vector<16x1xf32> to vector<16x32xf32>
    %20 = arith.mulf %15, %19 : vector<16x32xf32>
    %21 = vector.broadcast %1 : vector<1x32xf32> to vector<16x32xf32>
    %22 = arith.mulf %20, %21 : vector<16x32xf32>
    %23 = vector.broadcast %2 : vector<1x32xf32> to vector<16x32xf32>
    %24 = arith.addf %22, %23 : vector<16x32xf32>
    %c0_7 = arith.constant 0 : index
    %c0_8 = arith.constant 0 : index
    %25 = vector.load %arg1[%c0_7, %c0_8] : memref<128x256xbf16, #tpu.memory_space<vmem>>, vector<32x256xbf16>
    %c0_9 = arith.constant 0 : index
    %c0_10 = arith.constant 0 : index
    %26 = vector.load %arg2[%c0_9, %c0_10] : memref<88x256xf32, #tpu.memory_space<vmem>>, vector<1x256xf32>
    %27 = arith.truncf %24 : vector<16x32xf32> to vector<16x32xbf16>
    %cst_11 = arith.constant dense<0.000000e+00> : vector<16x256xf32>
    %28 = tpu.matmul %27, %25, %cst_11 {dimension_numbers = #tpu.dot_dimension_numbers<[1], [0], [0], [1], [0, 0, 1, 1], [], []>} : vector<16x32xbf16>, vector<32x256xbf16>, vector<16x256xf32> -> vector<16x256xf32>
    %29 = vector.broadcast %26 : vector<1x256xf32> to vector<16x256xf32>
    %30 = arith.addf %28, %29 : vector<16x256xf32>
    %31 = vector.extract_strided_slice %30 {offsets = [0, 0], sizes = [16, 96], strides = [1, 1]} : vector<16x256xf32> to vector<16x96xf32>
    %32 = vector.extract_strided_slice %30 {offsets = [0, 96], sizes = [16, 96], strides = [1, 1]} : vector<16x256xf32> to vector<16x96xf32>
    %33 = vector.extract_strided_slice %30 {offsets = [0, 192], sizes = [16, 64], strides = [1, 1]} : vector<16x256xf32> to vector<16x64xf32>
    %c8 = arith.constant 8 : index
    %c0_12 = arith.constant 0 : index
    %34 = vector.load %arg2[%c8, %c0_12] : memref<88x256xf32, #tpu.memory_space<vmem>>, vector<16x96xf32>
    %c8_13 = arith.constant 8 : index
    %c96 = arith.constant 96 : index
    %35 = vector.load %arg2[%c8_13, %c96] : memref<88x256xf32, #tpu.memory_space<vmem>>, vector<16x96xf32>
    %36 = arith.mulf %31, %34 : vector<16x96xf32>
    %37 = arith.mulf %32, %35 : vector<16x96xf32>
    %38 = arith.addf %36, %37 : vector<16x96xf32>
    %39 = vector.extract_strided_slice %38 {offsets = [0, 32], sizes = [16, 64], strides = [1, 1]} : vector<16x96xf32> to vector<16x64xf32>
    %c0_14 = arith.constant 0 : index
    %c32_15 = arith.constant 32 : index
    %40 = vector.load %arg3[%c0_14, %c32_15] : memref<16x128xf32, #tpu.memory_space<vmem>>, vector<16x64xf32>
    tpu.vector_store %arg3[%c0_14, %c32_15], %39 {strides = array<i32>} : memref<16x128xf32, #tpu.memory_space<vmem>>, vector<16x64xf32>,
    %41 = arith.truncf %38 : vector<16x96xf32> to vector<16x96xbf16>
    %42 = vector.extract_strided_slice %41 {offsets = [0, 0], sizes = [16, 32], strides = [1, 1]} : vector<16x96xbf16> to vector<16x32xbf16>
    %43 = vector.extract_strided_slice %41 {offsets = [0, 32], sizes = [16, 32], strides = [1, 1]} : vector<16x96xbf16> to vector<16x32xbf16>
    %44 = vector.extract_strided_slice %41 {offsets = [0, 64], sizes = [16, 32], strides = [1, 1]} : vector<16x96xbf16> to vector<16x32xbf16>
    %c32_16 = arith.constant 32 : index
    %c32_17 = arith.constant 32 : index
    %45 = vector.load %arg1[%c32_16, %c32_17] : memref<128x256xbf16, #tpu.memory_space<vmem>>, vector<64x32xbf16>
    %46 = tpu.concatenate %42, %42, %42, %42 in 0 : vector<16x32xbf16>, vector<16x32xbf16>, vector<16x32xbf16>, vector<16x32xbf16> -> vector<64x32xbf16>
    %47 = arith.mulf %46, %45 : vector<64x32xbf16>
    %cst_18 = arith.constant dense<0.000000e+00> : vector<64x16xf32>
    %48 = tpu.matmul %47, %43, %cst_18 {dimension_numbers = #tpu.dot_dimension_numbers<[1], [1], [0], [0], [0, 0, 1, 0], [], []>} : vector<64x32xbf16>, vector<16x32xbf16>, vector<64x16xf32> -> vector<64x16xf32>
    %c24 = arith.constant 24 : index
    %c0_19 = arith.constant 0 : index
    %49 = vector.load %arg2[%c24, %c0_19] : memref<88x256xf32, #tpu.memory_space<vmem>>, vector<64x16xf32>
    %50 = arith.addf %48, %49 : vector<64x16xf32>
    %cst_20 = arith.constant dense<0xFF800000> : vector<64xf32>
    %51 = vector.multi_reduction <maximumf>, %50, %cst_20 [1] : vector<64x16xf32> to vector<64xf32>
    %52 = vector.shape_cast %51 : vector<64xf32> to vector<64x1xf32>
    %53 = vector.broadcast %52 : vector<64x1xf32> to vector<64x16xf32>
    %54 = arith.subf %50, %53 : vector<64x16xf32>
    %55 = math.exp %54 : vector<64x16xf32>
    %cst_21 = arith.constant dense<0.000000e+00> : vector<64xf32>
    %56 = vector.multi_reduction <add>, %55, %cst_21 [1] : vector<64x16xf32> to vector<64xf32>
    %57 = vector.shape_cast %56 : vector<64xf32> to vector<64x1xf32>
    %58 = tpu.reciprocal %57 {approx = true} : vector<64x1xf32> -> vector<64x1xf32>
    %59 = vector.broadcast %58 : vector<64x1xf32> to vector<64x16xf32>
    %60 = arith.mulf %55, %59 : vector<64x16xf32>
    %61 = arith.truncf %60 : vector<64x16xf32> to vector<64x16xbf16>
    %cst_22 = arith.constant dense<0.000000e+00> : vector<64x32xf32>
    %62 = tpu.matmul %61, %44, %cst_22 {dimension_numbers = #tpu.dot_dimension_numbers<[1], [0], [0], [1], [0, 0, 1, 1], [], []>} : vector<64x16xbf16>, vector<16x32xbf16>, vector<64x32xf32> -> vector<64x32xf32>
    %63 = arith.extf %45 : vector<64x32xbf16> to vector<64x32xf32>
    %64 = arith.mulf %62, %63 : vector<64x32xf32>
    %65 = vector.extract_strided_slice %64 {offsets = [0, 0], sizes = [16, 32], strides = [1, 1]} : vector<64x32xf32> to vector<16x32xf32>
    %66 = vector.extract_strided_slice %64 {offsets = [16, 0], sizes = [16, 32], strides = [1, 1]} : vector<64x32xf32> to vector<16x32xf32>
    %67 = arith.addf %65, %66 : vector<16x32xf32>
    %68 = vector.extract_strided_slice %64 {offsets = [32, 0], sizes = [16, 32], strides = [1, 1]} : vector<64x32xf32> to vector<16x32xf32>
    %69 = arith.addf %67, %68 : vector<16x32xf32>
    %70 = vector.extract_strided_slice %64 {offsets = [48, 0], sizes = [16, 32], strides = [1, 1]} : vector<64x32xf32> to vector<16x32xf32>
    %71 = arith.addf %69, %70 : vector<16x32xf32>
    %cst_23 = arith.constant 5.000000e-01 : f32
    %72 = vector.broadcast %cst_23 : f32 to vector<16x64xf32>
    %73 = arith.mulf %72, %33 : vector<16x64xf32>
    %cst_24 = arith.constant 4.471500e-02 : f32
    %74 = vector.broadcast %cst_24 : f32 to vector<16x64xf32>
    %75 = arith.mulf %74, %33 : vector<16x64xf32>
    %76 = arith.mulf %75, %33 : vector<16x64xf32>
    %77 = arith.mulf %76, %33 : vector<16x64xf32>
    %78 = arith.addf %33, %77 : vector<16x64xf32>
    %cst_25 = arith.constant 0.797884583 : f32
    %79 = vector.broadcast %cst_25 : f32 to vector<16x64xf32>
    %80 = arith.mulf %79, %78 : vector<16x64xf32>
    %81 = math.tanh %80 : vector<16x64xf32>
    %cst_26 = arith.constant 1.000000e+00 : f32
    %82 = vector.broadcast %cst_26 : f32 to vector<16x64xf32>
    %83 = arith.addf %82, %81 : vector<16x64xf32>
    %84 = arith.mulf %73, %83 : vector<16x64xf32>
    %85 = tpu.concatenate %71, %84 in 1 : vector<16x32xf32>, vector<16x64xf32> -> vector<16x96xf32>
    %86 = arith.truncf %85 : vector<16x96xf32> to vector<16x96xbf16>
    %c32_27 = arith.constant 32 : index
    %c0_28 = arith.constant 0 : index
    %87 = vector.load %arg1[%c32_27, %c0_28] : memref<128x256xbf16, #tpu.memory_space<vmem>>, vector<96x32xbf16>
    %c1_29 = arith.constant 1 : index
    %c64 = arith.constant 64 : index
    %88 = vector.load %arg2[%c1_29, %c64] : memref<88x256xf32, #tpu.memory_space<vmem>>, vector<1x32xf32>
    %cst_30 = arith.constant dense<0.000000e+00> : vector<16x32xf32>
    %89 = tpu.matmul %86, %87, %cst_30 {dimension_numbers = #tpu.dot_dimension_numbers<[1], [0], [0], [1], [0, 0, 1, 1], [], []>} : vector<16x96xbf16>, vector<96x32xbf16>, vector<16x32xf32> -> vector<16x32xf32>
    %90 = vector.broadcast %88 : vector<1x32xf32> to vector<16x32xf32>
    %91 = arith.addf %89, %90 : vector<16x32xf32>
    %92 = arith.addf %91, %0 : vector<16x32xf32>
    %c0_31 = arith.constant 0 : index
    %c0_32 = arith.constant 0 : index
    %93 = vector.load %arg3[%c0_31, %c0_32] : memref<16x128xf32, #tpu.memory_space<vmem>>, vector<16x32xf32>
    tpu.vector_store %arg3[%c0_31, %c0_32], %92 {strides = array<i32>} : memref<16x128xf32, #tpu.memory_space<vmem>>, vector<16x32xf32>,
    return
  }
}

</mosaic_0001>

<llo_original>
// kernel: tpu_custom_call.1
$region0: #{tpu_custom_call.1}
  #allocation0 [shape = 'u32[]', space=smem, size = 0x4, offset = 0x4, fixed_abs, tag = 'smem constant byte address 0x4 - core index']
  #allocation1 [shape = 'u32[144,128]{1,0:T(1,128)}', space=vmem, size = 0x12000, scoped, tag = 'internal scratch']
  %s0 = inlined_call_operand.hbm [shape: f32[16,32], index: 0, kind: input, shape index: {}]
  %s1 = inlined_call_operand.hbm [shape: bf16[128,256], index: 1, kind: input, shape index: {}]
  %s2 = inlined_call_operand.hbm [shape: f32[88,256], index: 2, kind: input, shape index: {}]
  %s3 = inlined_call_operand.hbm [shape: f32[16,128], index: 3, kind: output, shape index: {}]
  %s4 = sld [smem:[#allocation0]]
  $region34: #{tpu_custom_call.1} parent=0
    _
  %s6 = ssub.s32 1, %s4
  %s7 = scalar_select 0, %s6, %s4
  $region1: #{tpu_custom_call.1} parent=0
    #allocation2 [shape = 'u8[8192]{0}', space=vmem, size = 0x2000, scoped, tag = 'input window, operand 0, single buffered']
    #allocation3 [shape = 's32[1]{0}', space=sflag, size = 0x4, scoped, tag = 'scoped memory for tpu_custom_call.1']
    #allocation4 [shape = 's32[1]{0}', space=sflag, size = 0x4, scoped, tag = 'scoped memory for tpu_custom_call.1']
    #allocation5 [shape = 'u8[65536]{0}', space=vmem, size = 0x10000, scoped, tag = 'input window, operand 1, single buffered']
    #allocation6 [shape = 's32[1]{0}', space=sflag, size = 0x4, scoped, tag = 'scoped memory for tpu_custom_call.1']
    #allocation7 [shape = 'u8[90112]{0}', space=vmem, size = 0x16000, scoped, tag = 'input window, operand 2, single buffered']
    #allocation8 [shape = 'u8[8192]{0}', space=vmem, size = 0x2000, scoped, tag = 'output window, operand 0, single buffered']
    %8 = vsyncpa [#allocation3], 0
    %9 = vsyncpa [#allocation6], 0
    %10 = vsyncpa [#allocation4], 0
    // Predicated region
    $region2: #{tpu_custom_call.1} parent=1 // pred_check
      _
    $region3: #{tpu_custom_call.1} parent=1 // pred_check_branch
      %12 = sbr.rel (0) target = $region5
    $region4: #{tpu_custom_call.1} parent=1 // pred_region
      %s14 = ssub.s32 256, 256
      %15 = vsyncadd [#allocation3], %s14
      %s16 = sshll.u32 [#allocation2], 4
      %s17 = int_to_ptr.vmem [resolvable:$true] %s16
      %22 = dma.hbm_to_vmem [thread:$0]  %s0, 256, %s17, [#allocation3], 128, 128, 8
    $region5: #{tpu_custom_call.1} parent=1 // pred_fallthru
      _
    // Predicated region
    $region6: #{tpu_custom_call.1} parent=1 // pred_check
      _
    $region7: #{tpu_custom_call.1} parent=1 // pred_check_branch
      %24 = sbr.rel (0) target = $region9
    $region8: #{tpu_custom_call.1} parent=1 // pred_region
      %s26 = ssub.s32 2048, 2048
      %27 = vsyncadd [#allocation6], %s26
      %s28 = sshll.u32 [#allocation5], 4
      %s29 = int_to_ptr.vmem [resolvable:$true] %s28
      %34 = dma.hbm_to_vmem [thread:$0]  %s1, 2048, %s29, [#allocation6], 128, 128, 8
    $region9: #{tpu_custom_call.1} parent=1 // pred_fallthru
      _
    // Predicated region
    $region10: #{tpu_custom_call.1} parent=1 // pred_check
      _
    $region11: #{tpu_custom_call.1} parent=1 // pred_check_branch
      %36 = sbr.rel (0) target = $region13
    $region12: #{tpu_custom_call.1} parent=1 // pred_region
      %s38 = ssub.s32 2816, 2816
      %39 = vsyncadd [#allocation6], %s38
      %s40 = sshll.u32 [#allocation7], 4
      %s41 = int_to_ptr.vmem [resolvable:$true] %s40
      %46 = dma.hbm_to_vmem [thread:$0]  %s2, 2816, %s41, [#allocation6], 256, 256, 16
    $region13: #{tpu_custom_call.1} parent=1 // pred_fallthru
      _
    // Predicated region
    $region14: #{tpu_custom_call.1} parent=1 // pred_check
      _
    $region15: #{tpu_custom_call.1} parent=1 // pred_check_branch
      %48 = sbr.rel (0) target = $region17
    $region16: #{tpu_custom_call.1} parent=1 // pred_region
      %49 = dma.done [#allocation3], 256
    $region17: #{tpu_custom_call.1} parent=1 // pred_fallthru
      _
    // Predicated region
    $region18: #{tpu_custom_call.1} parent=1 // pred_check
      _
    $region19: #{tpu_custom_call.1} parent=1 // pred_check_branch
      %51 = sbr.rel (0) target = $region21
    $region20: #{tpu_custom_call.1} parent=1 // pred_region
      %52 = dma.done [#allocation6], 2048
    $region21: #{tpu_custom_call.1} parent=1 // pred_fallthru
      _
    // Predicated region
    $region22: #{tpu_custom_call.1} parent=1 // pred_check
      _
    $region23: #{tpu_custom_call.1} parent=1 // pred_check_branch
      %54 = sbr.rel (0) target = $region25
    $region24: #{tpu_custom_call.1} parent=1 // pred_region
      %55 = dma.done [#allocation6], 2816
    $region25: #{tpu_custom_call.1} parent=1 // pred_fallthru
      _
    %v57 = vld [vmem:[#allocation2] sm:$0xff]
    %v58 = vld [vmem:[#allocation2 + $0x8] sm:$0xff]
    %v59 = vld [vmem:[#allocation7 + $0x1] ss:$0 sm:$0xff]
    %vm60 = vcmask 261120
    %v61 = vsel %vm60, %v57, 0.0
    %62 = vadd.xlane.f32.xlu0 %v61
    %v63 = vpop.xlane.xlu0 %62
    %v64 = vsel %vm60, %v58, 0.0
    %65 = vadd.xlane.f32.xlu0 %v64
    %v66 = vpop.xlane.xlu0 %65
    %v67 = vrcp.pop 32.0
    %v68 = vmul.f32 %v63, %v67
    %v69 = vmul.f32 %v66, %v67
    %v70 = vsub.f32 %v57, %v68
    %v71 = vsub.f32 %v58, %v69
    %v72 = vmul.f32 %v70, %v70
    %v73 = vmul.f32 %v71, %v71
    %v74 = vsel %vm60, %v72, 0.0
    %75 = vadd.xlane.f32.xlu0 %v74
    %v76 = vpop.xlane.xlu0 %75
    %v77 = vsel %vm60, %v73, 0.0
    %78 = vadd.xlane.f32.xlu0 %v77
    %v79 = vpop.xlane.xlu0 %78
    %v80 = vmul.f32 %v76, %v67
    %v81 = vmul.f32 %v79, %v67
    %v82 = vadd.f32 %v80, 1e-05
    %v83 = vadd.f32 %v81, 1e-05
    %v84 = vrsqrt.pop %v82
    %v85 = vrsqrt.pop %v83
    %v86 = vmul.f32 %v70, %v84
    %v87 = vmul.f32 %v71, %v85
    %v88 = vmul.f32 %v86, %v59
    %v89 = vmul.f32 %v87, %v59
    %91 = vrot.lane.b32.xlu0 %v59, 96
    %v92 = vpop.permute.xlu0 %91
    %v94 = vadd.f32 %v88, %v92
    %v95 = vadd.f32 %v89, %v92
    %v96 = vld [vmem:[#allocation5] sm:$0xff]
    %v97 = vld [vmem:[#allocation5 + $0x8] sm:$0xff]
    %v98 = vld [vmem:[#allocation5 + $0x10] sm:$0xff]
    %v99 = vld [vmem:[#allocation5 + $0x18] sm:$0xff]
    %v100 = vld [vmem:[#allocation7] ss:$8 sm:$0x3]
    %v101 = vpack.c.bf16 %v95, %v94
    %v103 = vlaneseq
    %v104 = vshrl.u32 %v103, 7
    %v105 = vsub.s32 0, %v104
    %v106 = vrot.slane %v100, %v105
    %v107 = vlaneseq
    %v108 = vshrl.u32 %v107, 7
    %v109 = vsub.s32 1, %v108
    %v110 = vrot.slane %v100, %v109
    %v117 = vunpack.c.l.b16 %v96
    %v118 = vunpack.c.h.b16 %v96
    %v119 = vunpack.c.l.b16 %v97
    %v120 = vunpack.c.h.b16 %v97
    %v121 = vunpack.c.l.b16 %v98
    %v122 = vunpack.c.h.b16 %v98
    %v123 = vunpack.c.l.b16 %v99
    %v124 = vunpack.c.h.b16 %v99
    %v125 = vpack.c.b16 %v119, %v117
    %v126 = vpack.c.b16 %v120, %v118
    %v127 = vpack.c.b16 %v123, %v121
    %v128 = vpack.c.b16 %v124, %v122
    %v134 = vsel %vm60, %v101, 0
    %136 = vmatprep.subr.bf16.mxu0 %v126
    %137 = vmatpush1.bf16.msra.mxu0 %v125
    %138 = vmatprep.subr.bf16.mxu0 %v128
    %139 = vmatpush1.bf16.msra.mxu0 %v127
    %140 = vmatprep.subr.bf16.mxu0 0
    %141 = vmatpush1.bf16.msra.mxu0 0
    %142 = vmatprep.subr.bf16.mxu0 0
    %143 = vmatpush1.bf16.msra.mxu0 0
    %144 = vmatprep.subr.bf16.mxu0 0
    %145 = vmatpush1.bf16.msra.mxu0 0
    %146 = vmatprep.subr.bf16.mxu0 0
    %147 = vmatpush1.bf16.msra.mxu0 0
    %148 = vmatprep.subr.bf16.mxu0 0
    %149 = vmatpush1.bf16.msra.mxu0 0
    %150 = vmatprep.subr.bf16.mxu0 0
    %151 = vmatpush1.bf16.msra.mxu0 0
    %152 = vmatprep.subr.bf16.mxu0 0
    %153 = vmatpush1.bf16.msra.mxu0 0
    %154 = vmatprep.subr.bf16.mxu0 0
    %155 = vmatpush1.bf16.msra.mxu0 0
    %156 = vmatprep.subr.bf16.mxu0 0
    %157 = vmatpush1.bf16.msra.mxu0 0
    %158 = vmatprep.subr.bf16.mxu0 0
    %159 = vmatpush1.bf16.msra.mxu0 0
    %160 = vmatprep.subr.bf16.mxu0 0
    %161 = vmatpush1.bf16.msra.mxu0 0
    %162 = vmatprep.subr.bf16.mxu0 0
    %163 = vmatpush1.bf16.msra.mxu0 0
    %164 = vmatprep.subr.bf16.mxu0 0
    %165 = vmatpush1.bf16.msra.mxu0 0
    %166 = vmatprep.subr.bf16.mxu0 0
    %167 = vmatpush1.bf16.msra.mxu0 0
    %168 = vmatprep.mubr.bf16.mxu0 0
    %169 = vmatmul.mubr.bf16.gmra.mrb[0].mxu0 %v134
    %v170 = vpop.f32.mrb[0].mxu0
    %v171 = vadd.f32 %v106, %v170
    %v172 = vpop.f32.mrb[0].mxu0
    %v173 = vadd.f32 %v110, %v172
    %v174 = vpop.f32.mrb[0].mxu0
    %v175 = vadd.f32 %v106, %v174
    %v176 = vpop.f32.mrb[0].mxu0
    %v177 = vadd.f32 %v110, %v176
    %178 = vdwg.mxu0
    %v179 = vld [vmem:[#allocation7 + $0x10] sm:$0xff]
    %v180 = vld [vmem:[#allocation7 + $0x20] sm:$0xff]
    %v181 = vld [vmem:[#allocation7 + $0x18] sm:$0xff]
    %v182 = vld [vmem:[#allocation7 + $0x28] sm:$0xff]
    %v183 = vmul.f32 %v171, %v179
    %v184 = vmul.f32 %v175, %v180
    %v185 = vmul.f32 %v173, %v181
    %v186 = vmul.f32 %v177, %v182
    %191 = vrot.lane.b32.xlu0 %v183, 32
    %v192 = vpop.permute.xlu0 %191
    %193 = vrot.lane.b32.xlu0 %v185, 32
    %v194 = vpop.permute.xlu0 %193
    %195 = vrot.lane.b32.xlu0 %v184, 32
    %v196 = vpop.permute.xlu0 %195
    %197 = vrot.lane.b32.xlu0 %v186, 32
    %v198 = vpop.permute.xlu0 %197
    %v199 = vsel %vm60, %v192, %v194
    %v200 = vsel %vm60, %v196, %v198
    %v203 = vadd.f32 %v183, %v199
    %v204 = vadd.f32 %v184, %v200
    %vm205 = vcmask 785664
    %206 = vst.msk [vmem:[#allocation8] sm:$0xff] %vm205, %v203
    %207 = vst.msk [vmem:[#allocation8 + $0x8] sm:$0xff] %vm205, %v204
    %v208 = vpack.c.bf16 %v204, %v203
    %v209 = vld [vmem:[#allocation5 + $0x20] sm:$0xf]
    %v210 = vld [vmem:[#allocation5 + $0x28] sm:$0xf]
    %v211 = vld [vmem:[#allocation5 + $0x30] sm:$0xf]
    %v212 = vld [vmem:[#allocation5 + $0x38] sm:$0xf]
    %v213 = vld [vmem:[#allocation5 + $0x40] sm:$0xf]
    %v214 = vld [vmem:[#allocation5 + $0x48] sm:$0xf]
    %v215 = vld [vmem:[#allocation5 + $0x50] sm:$0xf]
    %v216 = vld [vmem:[#allocation5 + $0x58] sm:$0xf]
    %v225 = vunpack.c.l.b16 %v209
    %v226 = vunpack.c.l.b16 %v210
    %v227 = vunpack.c.l.b16 %v211
    %v228 = vunpack.c.l.b16 %v212
    %v229 = vunpack.c.l.b16 %v213
    %v230 = vunpack.c.l.b16 %v214
    %v231 = vunpack.c.l.b16 %v215
    %v232 = vunpack.c.l.b16 %v216
    %v233 = vpack.c.b16 %v226, %v225
    %v234 = vpack.c.b16 %v228, %v227
    %v235 = vpack.c.b16 %v230, %v229
    %v236 = vpack.c.b16 %v232, %v231
    %237 = vrot.lane.b32.xlu0 %v233, 96
    %v238 = vpop.permute.xlu0 %237
    %239 = vrot.lane.b32.xlu0 %v234, 96
    %v240 = vpop.permute.xlu0 %239
    %241 = vrot.lane.b32.xlu0 %v235, 96
    %v242 = vpop.permute.xlu0 %241
    %243 = vrot.lane.b32.xlu0 %v236, 96
    %v244 = vpop.permute.xlu0 %243
    %v249 = vmul.bf16 %v208, %v238
    %v250 = vmul.bf16 %v208, %v240
    %v251 = vmul.bf16 %v208, %v242
    %v252 = vmul.bf16 %v208, %v244
    %v253 = vld [vmem:[#allocation7 + $0x30] sm:$0xff]
    %v254 = vld [vmem:[#allocation7 + $0x40] sm:$0xff]
    %v255 = vld [vmem:[#allocation7 + $0x50] sm:$0xff]
    %v256 = vld [vmem:[#allocation7 + $0x60] sm:$0xff]
    %v257 = vld [vmem:[#allocation7 + $0x70] sm:$0xff]
    %v258 = vld [vmem:[#allocation7 + $0x80] sm:$0xff]
    %v259 = vld [vmem:[#allocation7 + $0x90] sm:$0xff]
    %v260 = vld [vmem:[#allocation7 + $0xa0] sm:$0xff]
    %262 = vrot.lane.b32.xlu0 %v208, 96
    %v263 = vpop.permute.xlu0 %262
    %v265 = vsel %vm60, %v249, 0
    %v268 = vsel %vm60, %v250, 0
    %v271 = vsel %vm60, %v251, 0
    %v274 = vsel %vm60, %v252, 0
    %v277 = vsel %vm60, %v263, 0
    %279 = vmatprep.subr.bf16.mxu0 0
    %280 = vmatpush1.bf16.xpose.msra.mxu0 %v277
    %281 = vmatprep.subr.bf16.mxu0 0
    %282 = vmatpush1.bf16.xpose.msra.mxu0 0
    %283 = vmatprep.subr.bf16.mxu0 0
    %284 = vmatpush1.bf16.xpose.msra.mxu0 0
    %285 = vmatprep.subr.bf16.mxu0 0
    %286 = vmatpush1.bf16.xpose.msra.mxu0 0
    %287 = vmatprep.subr.bf16.mxu0 0
    %288 = vmatpush1.bf16.xpose.msra.mxu0 0
    %289 = vmatprep.subr.bf16.mxu0 0
    %290 = vmatpush1.bf16.xpose.msra.mxu0 0
    %291 = vmatprep.subr.bf16.mxu0 0
    %292 = vmatpush1.bf16.xpose.msra.mxu0 0
    %293 = vmatprep.subr.bf16.mxu0 0
    %294 = vmatpush1.bf16.xpose.msra.mxu0 0
    %295 = vmatprep.subr.bf16.mxu0 0
    %296 = vmatpush1.bf16.xpose.msra.mxu0 0
    %297 = vmatprep.subr.bf16.mxu0 0
    %298 = vmatpush1.bf16.xpose.msra.mxu0 0
    %299 = vmatprep.subr.bf16.mxu0 0
    %300 = vmatpush1.bf16.xpose.msra.mxu0 0
    %301 = vmatprep.subr.bf16.mxu0 0
    %302 = vmatpush1.bf16.xpose.msra.mxu0 0
    %303 = vmatprep.subr.bf16.mxu0 0
    %304 = vmatpush1.bf16.xpose.msra.mxu0 0
    %305 = vmatprep.subr.bf16.mxu0 0
    %306 = vmatpush1.bf16.xpose.msra.mxu0 0
    %307 = vmatprep.subr.bf16.mxu0 0
    %308 = vmatpush1.bf16.xpose.msra.mxu0 0
    %309 = vmatprep.subr.bf16.mxu0 0
    %310 = vmatpush1.bf16.xpose.msra.mxu0 0
    %311 = vmatprep.mubr.bf16.mxu0 0
    %312 = vmatmul.mubr.bf16.gmra.mrb[0].mxu0 %v265
    %v313 = vpop.f32.mrb[0].mxu0
    %v314 = vadd.f32 %v253, %v313
    %v315 = vpop.f32.mrb[0].mxu0
    %v316 = vpop.f32.mrb[0].mxu0
    %v317 = vadd.f32 %v254, %v316
    %v318 = vpop.f32.mrb[0].mxu0
    %319 = vmatprep.mubr.bf16.mxu0 0
    %320 = vmatmul.mubr.bf16.gmra.mrb[0].mxu0 %v268
    %v321 = vpop.f32.mrb[0].mxu0
    %v322 = vadd.f32 %v255, %v321
    %v323 = vpop.f32.mrb[0].mxu0
    %v324 = vpop.f32.mrb[0].mxu0
    %v325 = vadd.f32 %v256, %v324
    %v326 = vpop.f32.mrb[0].mxu0
    %327 = vmatprep.mubr.bf16.mxu0 0
    %328 = vmatmul.mubr.bf16.gmra.mrb[0].mxu0 %v271
    %v329 = vpop.f32.mrb[0].mxu0
    %v330 = vadd.f32 %v257, %v329
    %v331 = vpop.f32.mrb[0].mxu0
    %v332 = vpop.f32.mrb[0].mxu0
    %v333 = vadd.f32 %v258, %v332
    %v334 = vpop.f32.mrb[0].mxu0
    %335 = vmatprep.mubr.bf16.mxu0 0
    %336 = vmatmul.mubr.bf16.gmra.mrb[0].mxu0 %v274
    %v337 = vpop.f32.mrb[0].mxu0
    %v338 = vadd.f32 %v259, %v337
    %v339 = vpop.f32.mrb[0].mxu0
    %v340 = vpop.f32.mrb[0].mxu0
    %v341 = vadd.f32 %v260, %v340
    %v342 = vpop.f32.mrb[0].mxu0
    %343 = vdwg.mxu0
    %vm344 = vcmask 130048
    %v345 = vsel %vm344, %v314, -inf
    %346 = vmax.xlane.f32.xlu0 %v345
    %v347 = vpop.xlane.xlu0 %346
    %v348 = vsel %vm344, %v317, -inf
    %349 = vmax.xlane.f32.xlu0 %v348
    %v350 = vpop.xlane.xlu0 %349
    %v351 = vsel %vm344, %v322, -inf
    %352 = vmax.xlane.f32.xlu0 %v351
    %v353 = vpop.xlane.xlu0 %352
    %v354 = vsel %vm344, %v325, -inf
    %355 = vmax.xlane.f32.xlu0 %v354
    %v356 = vpop.xlane.xlu0 %355
    %v357 = vsel %vm344, %v330, -inf
    %358 = vmax.xlane.f32.xlu0 %v357
    %v359 = vpop.xlane.xlu0 %358
    %v360 = vsel %vm344, %v333, -inf
    %361 = vmax.xlane.f32.xlu0 %v360
    %v362 = vpop.xlane.xlu0 %361
    %v363 = vsel %vm344, %v338, -inf
    %364 = vmax.xlane.f32.xlu0 %v363
    %v365 = vpop.xlane.xlu0 %364
    %v366 = vsel %vm344, %v341, -inf
    %367 = vmax.xlane.f32.xlu0 %v366
    %v368 = vpop.xlane.xlu0 %367
    %v369 = vsub.f32 %v314, %v347
    %v370 = vsub.f32 %v317, %v350
    %v371 = vsub.f32 %v322, %v353
    %v372 = vsub.f32 %v325, %v356
    %v373 = vsub.f32 %v330, %v359
    %v374 = vsub.f32 %v333, %v362
    %v375 = vsub.f32 %v338, %v365
    %v376 = vsub.f32 %v341, %v368
    %v377 = vmul.f32 %v369, 1.442695
    %v378 = vpow.pop %v377
    %v379 = vmul.f32 %v370, 1.442695
    %v380 = vpow.pop %v379
    %v381 = vmul.f32 %v371, 1.442695
    %v382 = vpow.pop %v381
    %v383 = vmul.f32 %v372, 1.442695
    %v384 = vpow.pop %v383
    %v385 = vmul.f32 %v373, 1.442695
    %v386 = vpow.pop %v385
    %v387 = vmul.f32 %v374, 1.442695
    %v388 = vpow.pop %v387
    %v389 = vmul.f32 %v375, 1.442695
    %v390 = vpow.pop %v389
    %v391 = vmul.f32 %v376, 1.442695
    %v392 = vpow.pop %v391
    %v393 = vsel %vm344, %v378, 0.0
    %394 = vadd.xlane.f32.xlu0 %v393
    %v395 = vpop.xlane.xlu0 %394
    %v396 = vsel %vm344, %v380, 0.0
    %397 = vadd.xlane.f32.xlu0 %v396
    %v398 = vpop.xlane.xlu0 %397
    %v399 = vsel %vm344, %v382, 0.0
    %400 = vadd.xlane.f32.xlu0 %v399
    %v401 = vpop.xlane.xlu0 %400
    %v402 = vsel %vm344, %v384, 0.0
    %403 = vadd.xlane.f32.xlu0 %v402
    %v404 = vpop.xlane.xlu0 %403
    %v405 = vsel %vm344, %v386, 0.0
    %406 = vadd.xlane.f32.xlu0 %v405
    %v407 = vpop.xlane.xlu0 %406
    %v408 = vsel %vm344, %v388, 0.0
    %409 = vadd.xlane.f32.xlu0 %v408
    %v410 = vpop.xlane.xlu0 %409
    %v411 = vsel %vm344, %v390, 0.0
    %412 = vadd.xlane.f32.xlu0 %v411
    %v413 = vpop.xlane.xlu0 %412
    %v414 = vsel %vm344, %v392, 0.0
    %415 = vadd.xlane.f32.xlu0 %v414
    %v416 = vpop.xlane.xlu0 %415
    %v417 = vrcp.pop %v395
    %v418 = vrcp.pop %v398
    %v419 = vrcp.pop %v401
    %v420 = vrcp.pop %v404
    %v421 = vrcp.pop %v407
    %v422 = vrcp.pop %v410
    %v423 = vrcp.pop %v413
    %v424 = vrcp.pop %v416
    %v425 = vmul.f32 %v378, %v417
    %v426 = vmul.f32 %v380, %v418
    %v427 = vmul.f32 %v382, %v419
    %v428 = vmul.f32 %v384, %v420
    %v429 = vmul.f32 %v386, %v421
    %v430 = vmul.f32 %v388, %v422
    %v431 = vmul.f32 %v390, %v423
    %v432 = vmul.f32 %v392, %v424
    %v433 = vpack.c.bf16 %v426, %v425
    %v434 = vpack.c.bf16 %v428, %v427
    %v435 = vpack.c.bf16 %v430, %v429
    %v436 = vpack.c.bf16 %v432, %v431
    %437 = vrot.lane.b32.xlu0 %v208, 64
    %v438 = vpop.permute.xlu0 %437
    %v441 = vsel %vm344, %v433, 0
    %v444 = vsel %vm344, %v434, 0
    %v447 = vsel %vm344, %v435, 0
    %v450 = vsel %vm344, %v436, 0
    %452 = vmatprep.subr.bf16.mxu0 0
    %453 = vmatpush1.bf16.msra.mxu0 %v438
    %454 = vmatprep.subr.bf16.mxu0 0
    %455 = vmatpush1.bf16.msra.mxu0 0
    %456 = vmatprep.subr.bf16.mxu0 0
    %457 = vmatpush1.bf16.msra.mxu0 0
    %458 = vmatprep.subr.bf16.mxu0 0
    %459 = vmatpush1.bf16.msra.mxu0 0
    %460 = vmatprep.subr.bf16.mxu0 0
    %461 = vmatpush1.bf16.msra.mxu0 0
    %462 = vmatprep.subr.bf16.mxu0 0
    %463 = vmatpush1.bf16.msra.mxu0 0
    %464 = vmatprep.subr.bf16.mxu0 0
    %465 = vmatpush1.bf16.msra.mxu0 0
    %466 = vmatprep.subr.bf16.mxu0 0
    %467 = vmatpush1.bf16.msra.mxu0 0
    %468 = vmatprep.subr.bf16.mxu0 0
    %469 = vmatpush1.bf16.msra.mxu0 0
    %470 = vmatprep.subr.bf16.mxu0 0
    %471 = vmatpush1.bf16.msra.mxu0 0
    %472 = vmatprep.subr.bf16.mxu0 0
    %473 = vmatpush1.bf16.msra.mxu0 0
    %474 = vmatprep.subr.bf16.mxu0 0
    %475 = vmatpush1.bf16.msra.mxu0 0
    %476 = vmatprep.subr.bf16.mxu0 0
    %477 = vmatpush1.bf16.msra.mxu0 0
    %478 = vmatprep.subr.bf16.mxu0 0
    %479 = vmatpush1.bf16.msra.mxu0 0
    %480 = vmatprep.subr.bf16.mxu0 0
    %481 = vmatpush1.bf16.msra.mxu0 0
    %482 = vmatprep.subr.bf16.mxu0 0
    %483 = vmatpush1.bf16.msra.mxu0 0
    %484 = vmatprep.mubr.bf16.mxu0 0
    %485 = vmatmul.mubr.bf16.gmra.mrb[0].mxu0 %v441
    %v486 = vpop.f32.mrb[0].mxu0
    %v487 = vadd.f32 0.0, %v486
    %v488 = vpop.f32.mrb[0].mxu0
    %v489 = vpop.f32.mrb[0].mxu0
    %v490 = vadd.f32 0.0, %v489
    %v491 = vpop.f32.mrb[0].mxu0
    %492 = vmatprep.mubr.bf16.mxu0 0
    %493 = vmatmul.mubr.bf16.gmra.mrb[0].mxu0 %v444
    %v494 = vpop.f32.mrb[0].mxu0
    %v495 = vadd.f32 0.0, %v494
    %v496 = vpop.f32.mrb[0].mxu0
    %v497 = vpop.f32.mrb[0].mxu0
    %v498 = vadd.f32 0.0, %v497
    %v499 = vpop.f32.mrb[0].mxu0
    %500 = vmatprep.mubr.bf16.mxu0 0
    %501 = vmatmul.mubr.bf16.gmra.mrb[0].mxu0 %v447
    %v502 = vpop.f32.mrb[0].mxu0
    %v503 = vadd.f32 0.0, %v502
    %v504 = vpop.f32.mrb[0].mxu0
    %v505 = vpop.f32.mrb[0].mxu0
    %v506 = vadd.f32 0.0, %v505
    %v507 = vpop.f32.mrb[0].mxu0
    %508 = vmatprep.mubr.bf16.mxu0 0
    %509 = vmatmul.mubr.bf16.gmra.mrb[0].mxu0 %v450
    %v510 = vpop.f32.mrb[0].mxu0
    %v511 = vadd.f32 0.0, %v510
    %v512 = vpop.f32.mrb[0].mxu0
    %v513 = vpop.f32.mrb[0].mxu0
    %v514 = vadd.f32 0.0, %v513
    %v515 = vpop.f32.mrb[0].mxu0
    %516 = vdwg.mxu0
    %v517 = vunpack.c.l.bf16 %v209
    %v518 = vunpack.c.l.bf16 %v210
    %v519 = vunpack.c.l.bf16 %v211
    %v520 = vunpack.c.l.bf16 %v212
    %v521 = vunpack.c.l.bf16 %v213
    %v522 = vunpack.c.l.bf16 %v214
    %v523 = vunpack.c.l.bf16 %v215
    %v524 = vunpack.c.l.bf16 %v216
    %533 = vrot.lane.b32.xlu0 %v517, 96
    %v534 = vpop.permute.xlu0 %533
    %535 = vrot.lane.b32.xlu0 %v518, 96
    %v536 = vpop.permute.xlu0 %535
    %537 = vrot.lane.b32.xlu0 %v519, 96
    %v538 = vpop.permute.xlu0 %537
    %539 = vrot.lane.b32.xlu0 %v520, 96
    %v540 = vpop.permute.xlu0 %539
    %541 = vrot.lane.b32.xlu0 %v521, 96
    %v542 = vpop.permute.xlu0 %541
    %543 = vrot.lane.b32.xlu0 %v522, 96
    %v544 = vpop.permute.xlu0 %543
    %545 = vrot.lane.b32.xlu0 %v523, 96
    %v546 = vpop.permute.xlu0 %545
    %547 = vrot.lane.b32.xlu0 %v524, 96
    %v548 = vpop.permute.xlu0 %547
    %v557 = vmul.f32 %v487, %v534
    %v558 = vmul.f32 %v490, %v536
    %v559 = vmul.f32 %v495, %v538
    %v560 = vmul.f32 %v498, %v540
    %v561 = vmul.f32 %v503, %v542
    %v562 = vmul.f32 %v506, %v544
    %v563 = vmul.f32 %v511, %v546
    %v564 = vmul.f32 %v514, %v548
    %v565 = vadd.f32 %v557, %v559
    %v566 = vadd.f32 %v558, %v560
    %v567 = vadd.f32 %v565, %v561
    %v568 = vadd.f32 %v566, %v562
    %v569 = vadd.f32 %v567, %v563
    %v570 = vadd.f32 %v568, %v564
    %v571 = vmul.f32 %v173, 0.5
    %v572 = vmul.f32 %v177, 0.5
    %v573 = vmul.f32 %v173, 0.044715
    %v574 = vmul.f32 %v177, 0.044715
    %v575 = vmul.f32 %v573, %v173
    %v576 = vmul.f32 %v574, %v177
    %v577 = vmul.f32 %v575, %v173
    %v578 = vmul.f32 %v576, %v177
    %v579 = vadd.f32 %v173, %v577
    %v580 = vadd.f32 %v177, %v578
    %v581 = vmul.f32 %v579, 0.7978846
    %v582 = vmul.f32 %v580, 0.7978846
    %v583 = vtanh.pop %v581
    %v584 = vtanh.pop %v582
    %v585 = vadd.f32 %v583, 1.0
    %v586 = vadd.f32 %v584, 1.0
    %v587 = vmul.f32 %v571, %v585
    %v588 = vmul.f32 %v572, %v586
    %591 = vrot.lane.b32.xlu0 %v587, 96
    %v592 = vpop.permute.xlu0 %591
    %593 = vrot.lane.b32.xlu0 %v588, 96
    %v594 = vpop.permute.xlu0 %593
    %v597 = vsel %vm60, %v569, %v592
    %v598 = vsel %vm60, %v570, %v594
    %v599 = vpack.c.bf16 %v598, %v597
    %v600 = vld [vmem:[#allocation5 + $0x20] sm:$0xf]
    %v601 = vld [vmem:[#allocation5 + $0x28] sm:$0xf]
    %v602 = vld [vmem:[#allocation5 + $0x30] sm:$0xf]
    %v603 = vld [vmem:[#allocation5 + $0x38] sm:$0xf]
    %v604 = vld [vmem:[#allocation5 + $0x40] sm:$0xf]
    %v605 = vld [vmem:[#allocation5 + $0x48] sm:$0xf]
    %v606 = vld [vmem:[#allocation5 + $0x50] sm:$0xf]
    %v607 = vld [vmem:[#allocation5 + $0x58] sm:$0xf]
    %v608 = vld [vmem:[#allocation5 + $0x60] sm:$0xf]
    %v609 = vld [vmem:[#allocation5 + $0x68] sm:$0xf]
    %v610 = vld [vmem:[#allocation5 + $0x70] sm:$0xf]
    %v611 = vld [vmem:[#allocation5 + $0x78] sm:$0xf]
    %v612 = vld [vmem:[#allocation7 + $0x1] ss:$0 sm:$0xff]
    %v625 = vunpack.c.l.b16 %v600
    %v626 = vunpack.c.l.b16 %v601
    %v627 = vunpack.c.l.b16 %v602
    %v628 = vunpack.c.l.b16 %v603
    %v629 = vunpack.c.l.b16 %v604
    %v630 = vunpack.c.l.b16 %v605
    %v631 = vunpack.c.l.b16 %v606
    %v632 = vunpack.c.l.b16 %v607
    %v633 = vunpack.c.l.b16 %v608
    %v634 = vunpack.c.l.b16 %v609
    %v635 = vunpack.c.l.b16 %v610
    %v636 = vunpack.c.l.b16 %v611
    %v637 = vpack.c.b16 %v626, %v625
    %v638 = vpack.c.b16 %v628, %v627
    %v639 = vpack.c.b16 %v630, %v629
    %v640 = vpack.c.b16 %v632, %v631
    %v641 = vpack.c.b16 %v634, %v633
    %v642 = vpack.c.b16 %v636, %v635
    %650 = vrot.lane.b32.xlu0 %v612, 64
    %v651 = vpop.permute.xlu0 %650
    %vm653 = vcmask 785408
    %v655 = vsel %vm653, %v599, 0
    %657 = vmatprep.subr.bf16.mxu0 0
    %658 = vmatpush1.bf16.msra.mxu0 %v637
    %659 = vmatprep.subr.bf16.mxu0 0
    %660 = vmatpush1.bf16.msra.mxu0 %v638
    %661 = vmatprep.subr.bf16.mxu0 0
    %662 = vmatpush1.bf16.msra.mxu0 %v639
    %663 = vmatprep.subr.bf16.mxu0 0
    %664 = vmatpush1.bf16.msra.mxu0 %v640
    %665 = vmatprep.subr.bf16.mxu0 0
    %666 = vmatpush1.bf16.msra.mxu0 %v641
    %667 = vmatprep.subr.bf16.mxu0 0
    %668 = vmatpush1.bf16.msra.mxu0 %v642
    %669 = vmatprep.subr.bf16.mxu0 0
    %670 = vmatpush1.bf16.msra.mxu0 0
    %671 = vmatprep.subr.bf16.mxu0 0
    %672 = vmatpush1.bf16.msra.mxu0 0
    %673 = vmatprep.subr.bf16.mxu0 0
    %674 = vmatpush1.bf16.msra.mxu0 0
    %675 = vmatprep.subr.bf16.mxu0 0
    %676 = vmatpush1.bf16.msra.mxu0 0
    %677 = vmatprep.subr.bf16.mxu0 0
    %678 = vmatpush1.bf16.msra.mxu0 0
    %679 = vmatprep.subr.bf16.mxu0 0
    %680 = vmatpush1.bf16.msra.mxu0 0
    %681 = vmatprep.subr.bf16.mxu0 0
    %682 = vmatpush1.bf16.msra.mxu0 0
    %683 = vmatprep.subr.bf16.mxu0 0
    %684 = vmatpush1.bf16.msra.mxu0 0
    %685 = vmatprep.subr.bf16.mxu0 0
    %686 = vmatpush1.bf16.msra.mxu0 0
    %687 = vmatprep.subr.bf16.mxu0 0
    %688 = vmatpush1.bf16.msra.mxu0 0
    %689 = vmatprep.mubr.bf16.mxu0 0
    %690 = vmatmul.mubr.bf16.gmra.mrb[0].mxu0 %v655
    %v691 = vpop.f32.mrb[0].mxu0
    %v692 = vadd.f32 %v651, %v691
    %v693 = vpop.f32.mrb[0].mxu0
    %v694 = vpop.f32.mrb[0].mxu0
    %v695 = vadd.f32 %v651, %v694
    %v696 = vpop.f32.mrb[0].mxu0
    %697 = vdwg.mxu0
    %v698 = vadd.f32 %v692, %v57
    %v699 = vadd.f32 %v695, %v58
    %700 = vst.msk [vmem:[#allocation8] sm:$0xff] %vm60, %v698
    %701 = vst.msk [vmem:[#allocation8 + $0x8] sm:$0xff] %vm60, %v699
    // Predicated region
    $region26: #{tpu_custom_call.1} parent=1 // pred_check
      _
    $region27: #{tpu_custom_call.1} parent=1 // pred_check_branch
      %703 = sbr.rel (0) target = $region29
    $region28: #{tpu_custom_call.1} parent=1 // pred_region
      %s705 = ssub.s32 256, 256
      %706 = vsyncadd [#allocation4], %s705
      %s707 = sshll.u32 [#allocation8], 4
      %s708 = int_to_ptr.vmem [resolvable:$true] %s707
      %713 = dma.vmem_to_hbm [thread:$0]  %s708, 256, %s3, [#allocation4], 128, 128, 8
    $region29: #{tpu_custom_call.1} parent=1 // pred_fallthru
      _
    // Predicated region
    $region30: #{tpu_custom_call.1} parent=1 // pred_check
      _
    $region31: #{tpu_custom_call.1} parent=1 // pred_check_branch
      %715 = sbr.rel (0) target = $region33
    $region32: #{tpu_custom_call.1} parent=1 // pred_region
      %716 = dma.done [#allocation4], 256
    $region33: #{tpu_custom_call.1} parent=1 // pred_fallthru
      _
    %717 = vsyncpa [#allocation3], 1
    %718 = vsyncpa [#allocation6], 1
    %719 = vsyncpa [#allocation4], 1

</llo_original>
